<compile_context>
chip_gen: v6e
topology: v6e:2x2x1
jax: 0.10.0
libtpu: 0.0.40
codegen_flags: <defaults>
</compile_context>

<pallas_src>
import math

import numpy as np
import jax
import jax.numpy as jnp
from jax.experimental import pallas as pl
from jax.experimental.pallas import tpu as pltpu


def _build_encoding(embed_dim: int, max_len: int) -> np.ndarray:
    """Replicates the PyTorch __init__ sinusoidal table: shape (max_len, embed_dim-1)."""
    d = embed_dim - 1
    enc = np.zeros((max_len, d), dtype=np.float32)
    position = np.arange(0, max_len, dtype=np.float32)[:, None]                 # (L, 1)
    div_term = np.exp(
        np.arange(0, d, 2, dtype=np.float32) * (-math.log(10000.0) / d)
    )                                                                            # (ceil(d/2),)
    enc[:, 0::2] = np.sin(position * div_term)
    enc[:, 1::2] = np.cos(position * div_term[: d // 2])
    return enc


def _pe_kernel(x_ref, pe_ref, t_ref, o_ref):
    # x_ref : (1, tile_s, D)  activation block            (VMEM)
    # pe_ref: (1, tile_s, D)  pre-scaled (0.5*) PE block  (VMEM)
    # t_ref : (B,)            per-batch timesteps         (SMEM)
    # o_ref : (1, tile_s, E)  output block                (VMEM)
    _, ts, E = o_ref.shape
    D = E - 1
    # Main payload: one VPU add, one store.
    o_ref[:, :, :D] = x_ref[...] + pe_ref[...]
    # Timestep lane: per-batch scalar read from SMEM, broadcast over the seq tile.
    b = pl.program_id(0)
    t = t_ref[b]
    o_ref[:, :, D:] = jnp.full((1, ts, 1), t, dtype=o_ref.dtype)


def positional_encoding_forward(x, timesteps, *, embed_dim: int, max_len: int = 8,
                                seq_tile: int = 512):
    """x: (B, S, embed_dim-1) float32; timesteps: (B, 1) float32 in [0, 1]."""
    B, S, D = x.shape
    assert D == embed_dim - 1
    assert S <= max_len
    E = embed_dim

    # Trace-time constant: 0.5 * pe, shaped (1, S, D) so the kernel does a plain add.
    pe = jnp.asarray(0.5 * _build_encoding(embed_dim, max_len)[:S, :],
                     dtype=x.dtype)[None]                                        # (1, S, D)

    # Timesteps as a flat (B,) scalar vector -> SMEM (pads to a few bytes only).
    t = timesteps.reshape(B).astype(x.dtype)

    # Seq tiling: full S for small inputs; bounded tiles for large ones so
    # double-buffered x/out blocks stay well under the scoped VMEM limit on v7x/v5e.
    tile_s = seq_tile if (S > seq_tile and S % seq_tile == 0) else S
    grid = (B, S // tile_s)

    out = pl.pallas_call(
        _pe_kernel,
        out_shape=jax.ShapeDtypeStruct((B, S, E), x.dtype),
        grid=grid,
        in_specs=[
            pl.BlockSpec((1, tile_s, D), lambda b, s: (b, s, 0)),                # x
            pl.BlockSpec((1, tile_s, D), lambda b, s: (0, s, 0)),                # pe
            pl.BlockSpec(memory_space=pltpu.MemorySpace.SMEM),                   # timesteps
        ],
        out_specs=pl.BlockSpec((1, tile_s, E), lambda b, s: (b, s, 0)),
        compiler_params=pltpu.CompilerParams(
            dimension_semantics=("parallel", "parallel")),
    )(x, pe, t)
    return out


def _reference(x, timesteps, *, embed_dim: int, max_len: int = 8):
    B, S, D = x.shape
    pe = jnp.asarray(_build_encoding(embed_dim, max_len))[None, :S, :] * 0.5
    t = jnp.broadcast_to(timesteps[:, None, :], (B, S, 1))
    return jnp.concatenate([x + pe, t], axis=-1)


if __name__ == "__main__":
    key = jax.random.PRNGKey(0)
    k_x, k_t = jax.random.split(key)

    B, S, embed_dim, max_len = 2, 8, 8, 8
    D = embed_dim - 1

    x = jax.random.normal(k_x, (B, S, D), dtype=jnp.float32)
    timesteps = jax.random.uniform(k_t, (B, 1), dtype=jnp.float32)

    out = positional_encoding_forward(x, timesteps, embed_dim=embed_dim, max_len=max_len)
    out = jax.block_until_ready(out)

    ref = _reference(x, timesteps, embed_dim=embed_dim, max_len=max_len)
    assert out.shape == (B, S, embed_dim), out.shape
    assert jnp.allclose(out, ref, atol=1e-6, rtol=1e-6), "mismatch vs reference"

    print("KERNEL_OK")
</pallas_src>

<mosaic_0001>
module attributes {stable_mosaic.version = 11 : i64} {
  func.func @_pe_kernel(%arg0: i32, %arg1: i32, %arg2: memref<1x8x7xf32, #tpu.memory_space<vmem>>, %arg3: memref<1x8x7xf32, #tpu.memory_space<vmem>>, %arg4: memref<2xf32, #tpu.memory_space<smem>>, %arg5: memref<1x8x8xf32, #tpu.memory_space<vmem>>) attributes {dimension_semantics = [#tpu.dimension_semantics<parallel>, #tpu.dimension_semantics<parallel>], iteration_bounds = array<i64: 2, 1>, scalar_prefetch = 0 : i64, scratch_operands = 0 : i64, tpu.core_type = #tpu.core_type<tc>, window_params = [{transform_indices = @transform_0, window_bounds = array<i64: 1, 8, 7>}, {transform_indices = @transform_1, window_bounds = array<i64: 1, 8, 7>}, {transform_indices = @transform_2, window_bounds = array<i64: 2>}, {transform_indices = @transform_3, window_bounds = array<i64: 1, 8, 8>}]} {
    %c0 = arith.constant 0 : index
    %c0_0 = arith.constant 0 : index
    %c0_1 = arith.constant 0 : index
    %0 = vector.load %arg2[%c0, %c0_0, %c0_1] : memref<1x8x7xf32, #tpu.memory_space<vmem>>, vector<1x8x7xf32>
    %c0_2 = arith.constant 0 : index
    %c0_3 = arith.constant 0 : index
    %c0_4 = arith.constant 0 : index
    %1 = vector.load %arg3[%c0_2, %c0_3, %c0_4] : memref<1x8x7xf32, #tpu.memory_space<vmem>>, vector<1x8x7xf32>
    %2 = arith.addf %0, %1 : vector<1x8x7xf32>
    %c0_5 = arith.constant 0 : index
    %c0_6 = arith.constant 0 : index
    %c0_7 = arith.constant 0 : index
    %3 = vector.load %arg5[%c0_5, %c0_6, %c0_7] : memref<1x8x8xf32, #tpu.memory_space<vmem>>, vector<1x8x7xf32>
    tpu.vector_store %arg5[%c0_5, %c0_6, %c0_7], %2 {strides = array<i32>} : memref<1x8x8xf32, #tpu.memory_space<vmem>>, vector<1x8x7xf32>,
    %4 = arith.index_cast %arg0 : i32 to index
    %5 = memref.load %arg4[%4] : memref<2xf32, #tpu.memory_space<smem>>
    %6 = vector.broadcast %5 : f32 to vector<1x8x1xf32>
    %c0_8 = arith.constant 0 : index
    %c0_9 = arith.constant 0 : index
    %c7 = arith.constant 7 : index
    %7 = vector.load %arg5[%c0_8, %c0_9, %c7] : memref<1x8x8xf32, #tpu.memory_space<vmem>>, vector<1x8x1xf32>
    tpu.vector_store %arg5[%c0_8, %c0_9, %c7], %6 {strides = array<i32>} : memref<1x8x8xf32, #tpu.memory_space<vmem>>, vector<1x8x1xf32>,
    return
  }
  func.func @transform_0(%arg0: i32, %arg1: i32) -> (i32, i32, i32) {
    %c0_i32 = arith.constant 0 : i32
    %c0_i32_0 = arith.constant 0 : i32
    return %arg0, %arg1, %c0_i32 : i32, i32, i32
  }
  func.func @transform_1(%arg0: i32, %arg1: i32) -> (i32, i32, i32) {
    %c0_i32 = arith.constant 0 : i32
    %c0_i32_0 = arith.constant 0 : i32
    %c0_i32_1 = arith.constant 0 : i32
    return %c0_i32, %arg1, %c0_i32_0 : i32, i32, i32
  }
  func.func @transform_2(%arg0: i32, %arg1: i32) -> i32 {
    %c0_i32 = arith.constant 0 : i32
    %c0_i32_0 = arith.constant 0 : i32
    return %c0_i32 : i32
  }
  func.func @transform_3(%arg0: i32, %arg1: i32) -> (i32, i32, i32) {
    %c0_i32 = arith.constant 0 : i32
    %c0_i32_0 = arith.constant 0 : i32
    return %arg0, %arg1, %c0_i32 : i32, i32, i32
  }
}

</mosaic_0001>

<llo_original>
// kernel: tpu_custom_call.1
$region0: #{tpu_custom_call.1}
  #allocation0 [shape = 'u32[]', space=smem, size = 0x4, offset = 0x4, fixed_abs, tag = 'smem constant byte address 0x4 - core index']
  #allocation1 [shape = 'u32[144,128]{1,0:T(1,128)}', space=vmem, size = 0x12000, scoped, tag = 'internal scratch']
  %s0 = inlined_call_operand.vmem [shape: f32[2,8,7], index: 0, kind: input, shape index: {}]
  %s1 = inlined_call_operand.vmem [shape: f32[1,8,7], index: 1, kind: input, shape index: {}]
  %s2 = inlined_call_operand.vmem [shape: f32[2], index: 2, kind: input, shape index: {}]
  %s3 = inlined_call_operand.hbm [shape: f32[2,8,8], index: 3, kind: output, shape index: {}]
  %s4 = sld [smem:[#allocation0]]
  $region49: #{tpu_custom_call.1} parent=0
    _
  %s6 = ssub.s32 1, %s4
  %s7 = scalar_select 0, %s6, %s4
  $region1: #{tpu_custom_call.1} parent=0
    #allocation2 [shape = 'u8[512]{0}', space=smem, size = 0x200, scoped, tag = 'input window, operand 2, single buffered']
    #allocation3 [shape = 's32[2]{0}', space=sflag, size = 0x8, scoped, tag = 'scoped memory for tpu_custom_call.1']
    #allocation4 [shape = 's32[2]{0}', space=sflag, size = 0x8, scoped, tag = 'scoped memory for tpu_custom_call.1']
    #allocation5 [shape = 'u8[8192]{0}', space=vmem, size = 0x2000, scoped, tag = 'output window, operand 0']
    %8 = vsyncpa [#allocation4], 0
    %9 = vsyncpa [#allocation3], 0
    %s10 = scalar_lea.sflag [#allocation3], 1
    %11 = vsyncpa %s10, 0
    loop: start=0, step=1, limit=4
    $region2: #{tpu_custom_call.1} parent=1 // loop_pre_header
      _
    $region3: #{tpu_custom_call.1} parent=1 // loop_header
      %s13 = sphi 0, %s17
      %p14 = scmp.ge.s32.totalorder %s13, 4
      %s20 = sphi 0, %s32
      %s21 = sphi 0, %s28
      %s22 = sphi 0, %s20
      %s23 = sphi 0, %s21
      %s24 = sphi 0, %s22
      %s25 = sphi 0, %s23
      %s37 = sphi 0, %s39
      %s40 = sphi 0, %s37
      %s41 = sphi 0, %s40
      %s57 = sphi 0, %s41
      %s63 = sphi 0, %s65
      %s66 = sphi 0, %s63
      %s67 = sphi 0, %s66
      %s83 = sphi 0, %s67
      %s87 = sphi 0, %s87
      %s89 = sphi 0, %s87
      %s90 = sphi 0, %s89
      %s104 = sphi 0, %s90
      %s112 = sphi 0, %s114
      %s115 = sphi 0, %s112
      %s116 = sphi 0, %s115
      %s132 = sphi 0, %s116
    $region4: #{tpu_custom_call.1} parent=1 // loop_header_branch
      %16 = sbr.rel (%p14) target = $region8
    $region5: #{tpu_custom_call.1} parent=1 // loop_body
      %s18 = ssub.s32 %s13, 1
      %s19 = ssub.s32 %s13, 2
      %s26 = sadd.s32 1, %s21
      %p27 = scmp.ge.s32.totalorder %s26, 1
      %s28 = scalar_select %p27, 0, %s26
      %s29 = sadd.s32 1, %s20
      %s30 = scalar_select %p27, %s29, %s20
      %p31 = scmp.ge.s32.totalorder %s30, 2
      %s32 = scalar_select %p31, 0, %s30
      %s33 = ssub.s32 %s20, %s32
      %s34 = ssub.s32 %s21, %s28
      %s35 = sor.u32 %s33, %s34
      %p36 = scmp.eq.s32.totalorder %s35, 0
      %s38 = sadd.s32 %s37, 1
      %s39 = scalar_select %p36, %s37, %s38
      %p42 = pneg %p36
      %p43 = scmp.eq.s32.totalorder %s13, 1
      %p44 = por %p42, %p43
      %p45 = scmp.ne.s32.totalorder %s37, %s40
      %p46 = scmp.eq.s32.totalorder %s13, 0
      %p47 = por %p45, %p46
      %p48 = scmp.ne.s32.totalorder %s37, %s40
      %p49 = scmp.eq.s32.totalorder %s18, 1
      %p50 = por %p48, %p49
      %p51 = scmp.ne.s32.totalorder %s40, %s41
      %p52 = scmp.eq.s32.totalorder %s18, 0
      %p53 = por %p51, %p52
      %p54 = scmp.ne.s32.totalorder %s40, %s41
      %p55 = scmp.eq.s32.totalorder %s19, 1
      %p56 = por %p54, %p55
      %p58 = scmp.ne.s32.totalorder %s41, %s57
      %p59 = scmp.eq.s32.totalorder %s19, 0
      %p60 = por %p58, %p59
      %s61 = ssub.s32 %s21, %s28
      %p62 = scmp.eq.s32.totalorder %s61, 0
      %s64 = sadd.s32 %s63, 1
      %s65 = scalar_select %p62, %s63, %s64
      %p68 = pneg %p62
      %p69 = scmp.eq.s32.totalorder %s13, 1
      %p70 = por %p68, %p69
      %p71 = scmp.ne.s32.totalorder %s63, %s66
      %p72 = scmp.eq.s32.totalorder %s13, 0
      %p73 = por %p71, %p72
      %p74 = scmp.ne.s32.totalorder %s63, %s66
      %p75 = scmp.eq.s32.totalorder %s18, 1
      %p76 = por %p74, %p75
      %p77 = scmp.ne.s32.totalorder %s66, %s67
      %p78 = scmp.eq.s32.totalorder %s18, 0
      %p79 = por %p77, %p78
      %p80 = scmp.ne.s32.totalorder %s66, %s67
      %p81 = scmp.eq.s32.totalorder %s19, 1
      %p82 = por %p80, %p81
      %p84 = scmp.ne.s32.totalorder %s67, %s83
      %p85 = scmp.eq.s32.totalorder %s19, 0
      %p86 = por %p84, %p85
      %s88 = sadd.s32 %s87, 1
      %p91 = scmp.eq.s32.totalorder %s13, 1
      %p92 = scmp.ne.s32.totalorder %s87, %s89
      %p93 = scmp.eq.s32.totalorder %s13, 0
      %p94 = por %p92, %p93
      %p95 = scmp.ne.s32.totalorder %s87, %s89
      %p96 = scmp.eq.s32.totalorder %s18, 1
      %p97 = por %p95, %p96
      %p98 = scmp.ne.s32.totalorder %s89, %s90
      %p99 = scmp.eq.s32.totalorder %s18, 0
      %p100 = por %p98, %p99
      %p101 = scmp.ne.s32.totalorder %s89, %s90
      %p102 = scmp.eq.s32.totalorder %s19, 1
      %p103 = por %p101, %p102
      %p105 = scmp.ne.s32.totalorder %s90, %s104
      %p106 = scmp.eq.s32.totalorder %s19, 0
      %p107 = por %p105, %p106
      %s108 = ssub.s32 %s20, %s32
      %s109 = ssub.s32 %s21, %s28
      %s110 = sor.u32 %s108, %s109
      %p111 = scmp.eq.s32.totalorder %s110, 0
      %s113 = sadd.s32 %s112, 1
      %s114 = scalar_select %p111, %s112, %s113
      %p117 = pneg %p111
      %p118 = scmp.eq.s32.totalorder %s13, 1
      %p119 = por %p117, %p118
      %p120 = scmp.ne.s32.totalorder %s112, %s115
      %p121 = scmp.eq.s32.totalorder %s13, 0
      %p122 = por %p120, %p121
      %p123 = scmp.ne.s32.totalorder %s112, %s115
      %p124 = scmp.eq.s32.totalorder %s18, 1
      %p125 = por %p123, %p124
      %p126 = scmp.ne.s32.totalorder %s115, %s116
      %p127 = scmp.eq.s32.totalorder %s18, 0
      %p128 = por %p126, %p127
      %p129 = scmp.ne.s32.totalorder %s115, %s116
      %p130 = scmp.eq.s32.totalorder %s19, 1
      %p131 = por %p129, %p130
      %p133 = scmp.ne.s32.totalorder %s116, %s132
      %p134 = scmp.eq.s32.totalorder %s19, 0
      %p135 = por %p133, %p134
      %p136 = scmp.le.s32.totalorder 1, %s13
      %p137 = scmp.lt.s32.totalorder %s13, 3
      %p138 = pnand %p136, %p137
      %p139 = pneg %p138
      // Predicated region
      $region9: #{tpu_custom_call.1} parent=5 // pred_check
        _
      $region10: #{tpu_custom_call.1} parent=5 // pred_check_branch
        %141 = sbr.rel (%p138) target = $region12
      $region11: #{tpu_custom_call.1} parent=5 // pred_region
        %s142 = ssub.s32 %s13, 1
        // Predicated region
        $region13: #{tpu_custom_call.1} parent=11 // pred_check
          %p143 = pneg %p79
        $region14: #{tpu_custom_call.1} parent=11 // pred_check_branch
          %145 = sbr.rel (%p143) target = $region16
        $region15: #{tpu_custom_call.1} parent=11 // pred_region
          %p146 = scmp.lt.s32.totalorder %s23, 0
          %s147 = scalar_select %p146, %s23, 0
          %s148 = smul.addr %s147, 8
          %s149 = scalar_lea.vmem %s1, %s148
        $region16: #{tpu_custom_call.1} parent=11 // pred_fallthru
          _
        // Predicated region
        $region17: #{tpu_custom_call.1} parent=11 // pred_check
          %p150 = pneg %p100
        $region18: #{tpu_custom_call.1} parent=11 // pred_check_branch
          %152 = sbr.rel (%p150) target = $region20
        $region19: #{tpu_custom_call.1} parent=11 // pred_region
          %s154 = ssub.s32 16, 16
          %155 = vsyncadd [#allocation4], %s154
          %s157 = sshll.u32 %s2, 4
          %s158 = int_to_ptr.vmem [resolvable:$true] %s157
          %160 = dma.vmem_to_smem %s158, 16, [#allocation2], [#allocation4]
        $region20: #{tpu_custom_call.1} parent=11 // pred_fallthru
          _
      $region12: #{tpu_custom_call.1} parent=5 // pred_fallthru
        _
      %p161 = scmp.lt.s32.totalorder %s13, 2
      // Predicated region
      $region21: #{tpu_custom_call.1} parent=5 // pred_check
        %p162 = pneg %p161
      $region22: #{tpu_custom_call.1} parent=5 // pred_check_branch
        %164 = sbr.rel (%p162) target = $region24
      $region23: #{tpu_custom_call.1} parent=5 // pred_region
        // Predicated region
        $region25: #{tpu_custom_call.1} parent=23 // pred_check
          %p165 = pneg %p47
        $region26: #{tpu_custom_call.1} parent=23 // pred_check_branch
          %167 = sbr.rel (%p165) target = $region28
        $region27: #{tpu_custom_call.1} parent=23 // pred_region
          %p168 = scmp.lt.s32.totalorder %s20, 1
          %s169 = scalar_select %p168, %s20, 1
          %p170 = scmp.lt.s32.totalorder %s21, 0
          %s171 = scalar_select %p170, %s21, 0
          %s172 = sadd.s32 %s171, %s169
          %s173 = smul.addr %s172, 8
          %s174 = scalar_lea.vmem %s0, %s173
        $region28: #{tpu_custom_call.1} parent=23 // pred_fallthru
          _
      $region24: #{tpu_custom_call.1} parent=5 // pred_fallthru
        _
      %p175 = scmp.le.s32.totalorder 1, %s13
      %p176 = scmp.lt.s32.totalorder %s13, 3
      %p177 = pnand %p175, %p176
      %p178 = pneg %p177
      // Predicated region
      $region29: #{tpu_custom_call.1} parent=5 // pred_check
        _
      $region30: #{tpu_custom_call.1} parent=5 // pred_check_branch
        %180 = sbr.rel (%p177) target = $region32
      $region31: #{tpu_custom_call.1} parent=5 // pred_region
        %s181 = ssub.s32 %s13, 1
        // Predicated region
        $region33: #{tpu_custom_call.1} parent=31 // pred_check
          %p182 = pneg %p100
        $region34: #{tpu_custom_call.1} parent=31 // pred_check_branch
          %184 = sbr.rel (%p182) target = $region36
        $region35: #{tpu_custom_call.1} parent=31 // pred_region
          %185 = dma.done [#allocation4], 16
        $region36: #{tpu_custom_call.1} parent=31 // pred_fallthru
          _
        %186 = sfence
        %p187 = scmp.lt.s32.totalorder %s22, 1
        %s188 = scalar_select %p187, %s22, 1
        %p189 = scmp.lt.s32.totalorder %s23, 0
        %s190 = scalar_select %p189, %s23, 0
        %s191 = sadd.s32 %s190, %s188
        %s192 = smul.addr %s191, 8
        %s193 = scalar_lea.vmem %s0, %s192
        %p194 = pneg %p53
        %p195 = pneg %p50
        %p196 = scmp.lt.s32.totalorder %s23, 0
        %s197 = scalar_select %p196, %s23, 0
        %s198 = smul.addr %s197, 8
        %s199 = scalar_lea.vmem %s1, %s198
        %p200 = pneg %p79
        %p201 = pneg %p76
        %p202 = pneg %p100
        %p203 = pneg %p97
        %p204 = pneg %p128
        %p205 = pneg %p125
        %s206 = sand.u32 %s115, 1
        %s207 = scalar_lea.sflag [#allocation3], %s206
        %s208 = sand.u32 %s115, 1
        %s209 = smul.addr %s208, 8
        %s210 = scalar_lea.vmem [#allocation5], %s209
        %p211 = scmp.lt.s32.totalorder %s22, 1
        %s212 = scalar_select %p211, %s22, 1
        %p213 = scmp.lt.s32.totalorder %s23, 0
        %s214 = scalar_select %p213, %s23, 0
        %s215 = sadd.s32 %s214, %s212
        %s216 = smul.addr %s215, 8
        %s217 = scalar_lea.vmem %s0, %s216
        %p218 = scmp.lt.s32.totalorder %s23, 0
        %s219 = scalar_select %p218, %s23, 0
        %s220 = smul.addr %s219, 8
        %s221 = scalar_lea.vmem %s1, %s220
        %v222 = vld [vmem:[%s217] sm:$0xff]
        %v223 = vld [vmem:[%s221] sm:$0xff]
        %v224 = vadd.f32 %v222, %v223
        %vm225 = vcmask 56320
        %226 = vst.msk [vmem:[%s210] sm:$0xff] %vm225, %v224
        %s227 = sld [smem:[#allocation2 + %s22]]
        %v228 = vstv %s227
        %vm229 = vcmask 64568
        %230 = vst.msk [vmem:[%s210] sm:$0xff] %vm229, %v228
        %s231 = sand.u32 %s115, 1
        %s232 = scalar_lea.sflag [#allocation3], %s231
        %s233 = sand.u32 %s115, 1
        %s234 = smul.addr %s233, 8
        %s235 = scalar_lea.vmem [#allocation5], %s234
        // Predicated region
        $region37: #{tpu_custom_call.1} parent=31 // pred_check
          %p236 = pneg %p125
        $region38: #{tpu_custom_call.1} parent=31 // pred_check_branch
          %238 = sbr.rel (%p236) target = $region40
        $region39: #{tpu_custom_call.1} parent=31 // pred_region
          %s240 = ssub.s32 128, 128
          %241 = vsyncadd %s232, %s240
          %s242 = sadd.s32 %s23, %s22
          %s243 = smul.addr %s242, 128
          %s244 = scalar_lea.hbm %s3, %s243
          %s246 = sshll.u32 %s235, 4
          %s247 = int_to_ptr.vmem [resolvable:$true] %s246
          %249 = dma.vmem_to_hbm [thread:$0]  %s247, 128, %s244, %s232
        $region40: #{tpu_custom_call.1} parent=31 // pred_fallthru
          _
      $region32: #{tpu_custom_call.1} parent=5 // pred_fallthru
        _
      %p250 = scmp.le.s32.totalorder 2, %s13
      // Predicated region
      $region41: #{tpu_custom_call.1} parent=5 // pred_check
        %p251 = pneg %p250
      $region42: #{tpu_custom_call.1} parent=5 // pred_check_branch
        %253 = sbr.rel (%p251) target = $region44
      $region43: #{tpu_custom_call.1} parent=5 // pred_region
        %s254 = ssub.s32 %s13, 2
        // Predicated region
        $region45: #{tpu_custom_call.1} parent=43 // pred_check
          %p255 = pneg %p131
        $region46: #{tpu_custom_call.1} parent=43 // pred_check_branch
          %257 = sbr.rel (%p255) target = $region48
        $region47: #{tpu_custom_call.1} parent=43 // pred_region
          %s258 = sand.u32 %s116, 1
          %s259 = scalar_lea.sflag [#allocation3], %s258
          %s260 = sand.u32 %s116, 1
          %s261 = smul.addr %s260, 8
          %s262 = scalar_lea.vmem [#allocation5], %s261
          %263 = dma.done %s259, 128
        $region48: #{tpu_custom_call.1} parent=43 // pred_fallthru
          _
      $region44: #{tpu_custom_call.1} parent=5 // pred_fallthru
        _
    $region6: #{tpu_custom_call.1} parent=1 // loop_footer
      %s17 = sadd.s32 1, %s13
    $region7: #{tpu_custom_call.1} parent=1 // loop_footer_branch
      %12 = sbr.rel target = $region3
    $region8: #{tpu_custom_call.1} parent=1 // loop_exit
      _
    %264 = vsyncpa [#allocation3], 1
    %s265 = scalar_lea.sflag [#allocation3], 1
    %266 = vsyncpa %s265, 1
    %267 = vsyncpa [#allocation4], 1
    %s268 = scalar_lea.sflag [#allocation4], 1
    %269 = vsyncpa %s268, 1

</llo_original>
